<compile_context>
chip_gen: v6e
topology: v6e:2x2x1
jax: 0.10.0
libtpu: 0.0.40
codegen_flags: <defaults>
</compile_context>

<pallas_src>
import jax
import jax.numpy as jnp
from jax.experimental import pallas as pl
from jax.experimental.pallas import tpu as pltpu


HIDDEN = (128, 64, 32)
# Multiple of 8 (f32 sublane).  Larger tiles amortize the ~0.35 us per-grid-step
# overhead that dominates this tiny MLP; footprint stays << VMEM on all chips.
_MAX_TILE_B = 1024


def _critic_kernel(state_ref, action_ref,
                   w1s_ref, w1a_ref, b1_ref,
                   w2_ref, b2_ref,
                   w3_ref, b3_ref,
                   w4_ref, b4_ref,
                   o_ref):
    cdt = w1s_ref.dtype  # MXU input dtype (f32 or bf16); accumulation is always f32

    # Layer 1 (fused concat): state @ W1_state + action @ W1_action + b1 -> ReLU
    h = jnp.dot(state_ref[...].astype(cdt), w1s_ref[...],
                preferred_element_type=jnp.float32)
    h = h + jnp.dot(action_ref[...].astype(cdt), w1a_ref[...],
                    preferred_element_type=jnp.float32)
    h = jnp.maximum(h + b1_ref[...], 0.0)

    # Layer 2: (TB, 128) @ (128, 64) + b2 -> ReLU
    h = jnp.dot(h.astype(cdt), w2_ref[...], preferred_element_type=jnp.float32)
    h = jnp.maximum(h + b2_ref[...], 0.0)

    # Layer 3: (TB, 64) @ (64, 32) + b3 -> ReLU
    h = jnp.dot(h.astype(cdt), w3_ref[...], preferred_element_type=jnp.float32)
    h = jnp.maximum(h + b3_ref[...], 0.0)

    # Layer 4 (out_features = 1): VPU multiply + XLU cross-lane reduce instead
    # of an N=1 MXU matmul; bias is a scalar read from SMEM.
    q = jnp.sum(h * w4_ref[...].astype(jnp.float32), axis=-1, keepdims=True)
    # NOTE: output stays (B, 1) to preserve the module's interface.  The store
    # is lane-sparse but only B*4 bytes total, negligible vs. the fixed
    # per-step cost for this network size.
    o_ref[...] = (q + b4_ref[0]).astype(o_ref.dtype)


def init_critic_params(key, observation_size, num_actions, dtype=jnp.float32):
    """PyTorch nn.Linear-style init: U(-1/sqrt(fan_in), 1/sqrt(fan_in))."""
    in_dim = observation_size + num_actions
    dims = [in_dim, HIDDEN[0], HIDDEN[1], HIDDEN[2], 1]
    params = []
    for i in range(4):
        key, kw, kb = jax.random.split(key, 3)
        bound = 1.0 / jnp.sqrt(jnp.asarray(dims[i], jnp.float32))
        # Stored (in_features, out_features) so forward is x @ W + b.
        w = jax.random.uniform(kw, (dims[i], dims[i + 1]), dtype,
                               minval=-bound, maxval=bound)
        b = jax.random.uniform(kb, (1, dims[i + 1]), dtype,
                               minval=-bound, maxval=bound)
        params.append((w, b))
    return params


def critic_forward(state, action, params, *, compute_dtype=None):
    """state: (B, obs), action: (B, act) -> q1: (B, 1).

    compute_dtype: optional MXU input dtype (e.g. jnp.bfloat16 on v6e/v7x);
    accumulation and elementwise math remain f32.
    """
    (w1, b1), (w2, b2), (w3, b3), (w4, b4) = params
    B, obs_dim = state.shape
    _, act_dim = action.shape
    in_dim = obs_dim + act_dim
    assert w1.shape[0] == in_dim, (w1.shape, in_dim)

    # Fused concat: split W1 by input rows (free), kernel sums partial matmuls.
    w1_s, w1_a = w1[:obs_dim], w1[obs_dim:]
    w4_row = w4.reshape(1, HIDDEN[2])   # (32, 1) -> (1, 32) row for the VPU path
    b4_scalar = b4.reshape(1)           # scalar bias -> SMEM

    if compute_dtype is not None:
        w1_s = w1_s.astype(compute_dtype)
        w1_a = w1_a.astype(compute_dtype)
        w2_c = w2.astype(compute_dtype)
        w3_c = w3.astype(compute_dtype)
        w4_c = w4_row.astype(compute_dtype)
    else:
        w2_c, w3_c, w4_c = w2, w3, w4_row
    # Biases stay f32 on purpose (f32 elementwise path; v5e has no bf16 VPU).

    tile_b = B if B <= _MAX_TILE_B else _MAX_TILE_B
    grid = (pl.cdiv(B, tile_b),)

    tiled = lambda shape: pl.BlockSpec(shape, lambda i: (i, 0))      # batch-tiled
    resident = lambda shape: pl.BlockSpec(shape, lambda i: (0, 0))   # VMEM-resident weights

    itemsize = lambda a: int(a.size) * jnp.dtype(a.dtype).itemsize
    flops = 2 * B * (in_dim * HIDDEN[0] + HIDDEN[0] * HIDDEN[1]
                     + HIDDEN[1] * HIDDEN[2] + HIDDEN[2])
    bytes_accessed = (4 * (int(state.size) + int(action.size) + B)
                      + sum(itemsize(a) for a in
                            (w1_s, w1_a, b1, w2_c, b2, w3_c, b3, w4_c, b4)))

    return pl.pallas_call(
        _critic_kernel,
        out_shape=jax.ShapeDtypeStruct((B, 1), state.dtype),
        grid=grid,
        in_specs=[
            tiled((tile_b, obs_dim)),
            tiled((tile_b, act_dim)),
            resident(w1_s.shape), resident(w1_a.shape), resident(b1.shape),
            resident(w2_c.shape), resident(b2.shape),
            resident(w3_c.shape), resident(b3.shape),
            resident(w4_c.shape),
            pl.BlockSpec(memory_space=pltpu.MemorySpace.SMEM),   # b4 scalar
        ],
        out_specs=tiled((tile_b, 1)),
        compiler_params=pltpu.CompilerParams(
            dimension_semantics=("parallel",),        # v7x: shard batch over 2 TCs
            vmem_limit_bytes=32 * 1024 * 1024,        # explicit, safe on all chips
        ),
        cost_estimate=pl.CostEstimate(
            flops=flops, transcendentals=0, bytes_accessed=bytes_accessed),
    )(state, action, w1_s, w1_a, b1, w2_c, b2, w3_c, b3, w4_c, b4_scalar)


def critic_forward_ref(state, action, params):
    """Pure-JAX reference (mirrors the PyTorch module)."""
    x = jnp.concatenate([state, action], axis=1)
    (w1, b1), (w2, b2), (w3, b3), (w4, b4) = params
    h = jnp.maximum(x @ w1 + b1, 0.0)
    h = jnp.maximum(h @ w2 + b2, 0.0)
    h = jnp.maximum(h @ w3 + b3, 0.0)
    return h @ w4 + b4


if __name__ == "__main__":
    observation_size = 16
    num_actions = 4
    batch = 8

    key = jax.random.PRNGKey(0)
    k_params, k_state, k_action = jax.random.split(key, 3)

    params = init_critic_params(k_params, observation_size, num_actions)
    state = jax.random.normal(k_state, (batch, observation_size), jnp.float32)
    action = jax.random.normal(k_action, (batch, num_actions), jnp.float32)

    # f32 path (single tile) vs reference.
    q1 = jax.block_until_ready(critic_forward(state, action, params))
    q1_ref = critic_forward_ref(state, action, params)
    assert q1.shape == (batch, 1), q1.shape
    assert jnp.allclose(q1, q1_ref, atol=1e-4, rtol=1e-4), "f32 mismatch vs reference"

    # bf16 MXU-input path (recommended on v6e/v7x), f32 accumulation.
    q1_bf16 = jax.block_until_ready(
        critic_forward(state, action, params, compute_dtype=jnp.bfloat16))
    assert jnp.allclose(q1_bf16, q1_ref, atol=1e-1, rtol=1e-1), "bf16 mismatch vs reference"

    # Multi-tile grid path with a ragged last tile (B > TILE_B).
    big_b = 2500
    ks, ka = jax.random.split(jax.random.PRNGKey(1))
    state_b = jax.random.normal(ks, (big_b, observation_size), jnp.float32)
    action_b = jax.random.normal(ka, (big_b, num_actions), jnp.float32)
    qb = jax.block_until_ready(critic_forward(state_b, action_b, params))
    qb_ref = critic_forward_ref(state_b, action_b, params)
    assert qb.shape == (big_b, 1), qb.shape
    assert jnp.allclose(qb, qb_ref, atol=1e-4, rtol=1e-4), "tiled mismatch vs reference"

    # TODO(synk): optimizer (Adam) and MSELoss from the module are training-side
    # and intentionally not part of this forward-pass kernel.
    print("KERNEL_OK")
</pallas_src>

<mosaic_0001>
module attributes {stable_mosaic.version = 11 : i64} {
  func.func @_critic_kernel(%arg0: i32, %arg1: memref<8x16xf32, #tpu.memory_space<vmem>>, %arg2: memref<8x4xf32, #tpu.memory_space<vmem>>, %arg3: memref<16x128xf32, #tpu.memory_space<vmem>>, %arg4: memref<4x128xf32, #tpu.memory_space<vmem>>, %arg5: memref<1x128xf32, #tpu.memory_space<vmem>>, %arg6: memref<128x64xf32, #tpu.memory_space<vmem>>, %arg7: memref<1x64xf32, #tpu.memory_space<vmem>>, %arg8: memref<64x32xf32, #tpu.memory_space<vmem>>, %arg9: memref<1x32xf32, #tpu.memory_space<vmem>>, %arg10: memref<1x32xf32, #tpu.memory_space<vmem>>, %arg11: memref<1xf32, #tpu.memory_space<smem>>, %arg12: memref<8x1xf32, #tpu.memory_space<vmem>>) attributes {dimension_semantics = [#tpu.dimension_semantics<parallel>], iteration_bounds = array<i64: 1>, scalar_prefetch = 0 : i64, scratch_operands = 0 : i64, tpu.core_type = #tpu.core_type<tc>, window_params = [{transform_indices = @transform_0, window_bounds = array<i64: 8, 16>}, {transform_indices = @transform_1, window_bounds = array<i64: 8, 4>}, {pipeline_mode = #tpu.pipeline_mode<synchronous>, transform_indices = @transform_2, window_bounds = array<i64: 16, 128>}, {pipeline_mode = #tpu.pipeline_mode<synchronous>, transform_indices = @transform_3, window_bounds = array<i64: 4, 128>}, {pipeline_mode = #tpu.pipeline_mode<synchronous>, transform_indices = @transform_4, window_bounds = array<i64: 1, 128>}, {pipeline_mode = #tpu.pipeline_mode<synchronous>, transform_indices = @transform_5, window_bounds = array<i64: 128, 64>}, {pipeline_mode = #tpu.pipeline_mode<synchronous>, transform_indices = @transform_6, window_bounds = array<i64: 1, 64>}, {pipeline_mode = #tpu.pipeline_mode<synchronous>, transform_indices = @transform_7, window_bounds = array<i64: 64, 32>}, {pipeline_mode = #tpu.pipeline_mode<synchronous>, transform_indices = @transform_8, window_bounds = array<i64: 1, 32>}, {pipeline_mode = #tpu.pipeline_mode<synchronous>, transform_indices = @transform_9, window_bounds = array<i64: 1, 32>}, {transform_indices = @transform_10, window_bounds = array<i64: 1>}, {transform_indices = @transform_11, window_bounds = array<i64: 8, 1>}]} {
    %c0 = arith.constant 0 : index
    %c0_0 = arith.constant 0 : index
    %0 = vector.load %arg1[%c0, %c0_0] : memref<8x16xf32, #tpu.memory_space<vmem>>, vector<8x16xf32>
    %c0_1 = arith.constant 0 : index
    %c0_2 = arith.constant 0 : index
    %1 = vector.load %arg3[%c0_1, %c0_2] : memref<16x128xf32, #tpu.memory_space<vmem>>, vector<16x128xf32>
    %cst = arith.constant dense<0.000000e+00> : vector<8x128xf32>
    %2 = tpu.matmul %0, %1, %cst {dimension_numbers = #tpu.dot_dimension_numbers<[1], [0], [0], [1], [0, 0, 1, 1], [], []>} : vector<8x16xf32>, vector<16x128xf32>, vector<8x128xf32> -> vector<8x128xf32>
    %c0_3 = arith.constant 0 : index
    %c0_4 = arith.constant 0 : index
    %3 = vector.load %arg2[%c0_3, %c0_4] : memref<8x4xf32, #tpu.memory_space<vmem>>, vector<8x4xf32>
    %c0_5 = arith.constant 0 : index
    %c0_6 = arith.constant 0 : index
    %4 = vector.load %arg4[%c0_5, %c0_6] : memref<4x128xf32, #tpu.memory_space<vmem>>, vector<4x128xf32>
    %cst_7 = arith.constant dense<0.000000e+00> : vector<8x128xf32>
    %5 = tpu.matmul %3, %4, %cst_7 {dimension_numbers = #tpu.dot_dimension_numbers<[1], [0], [0], [1], [0, 0, 1, 1], [], []>} : vector<8x4xf32>, vector<4x128xf32>, vector<8x128xf32> -> vector<8x128xf32>
    %6 = arith.addf %2, %5 : vector<8x128xf32>
    %c0_8 = arith.constant 0 : index
    %c0_9 = arith.constant 0 : index
    %7 = vector.load %arg5[%c0_8, %c0_9] : memref<1x128xf32, #tpu.memory_space<vmem>>, vector<1x128xf32>
    %8 = vector.broadcast %7 : vector<1x128xf32> to vector<8x128xf32>
    %9 = arith.addf %6, %8 : vector<8x128xf32>
    %cst_10 = arith.constant 0.000000e+00 : f32
    %10 = vector.broadcast %cst_10 : f32 to vector<8x128xf32>
    %11 = arith.maximumf %9, %10 : vector<8x128xf32>
    %c0_11 = arith.constant 0 : index
    %c0_12 = arith.constant 0 : index
    %12 = vector.load %arg6[%c0_11, %c0_12] : memref<128x64xf32, #tpu.memory_space<vmem>>, vector<128x64xf32>
    %cst_13 = arith.constant dense<0.000000e+00> : vector<8x64xf32>
    %13 = tpu.matmul %11, %12, %cst_13 {dimension_numbers = #tpu.dot_dimension_numbers<[1], [0], [0], [1], [0, 0, 1, 1], [], []>} : vector<8x128xf32>, vector<128x64xf32>, vector<8x64xf32> -> vector<8x64xf32>
    %c0_14 = arith.constant 0 : index
    %c0_15 = arith.constant 0 : index
    %14 = vector.load %arg7[%c0_14, %c0_15] : memref<1x64xf32, #tpu.memory_space<vmem>>, vector<1x64xf32>
    %15 = vector.broadcast %14 : vector<1x64xf32> to vector<8x64xf32>
    %16 = arith.addf %13, %15 : vector<8x64xf32>
    %cst_16 = arith.constant 0.000000e+00 : f32
    %17 = vector.broadcast %cst_16 : f32 to vector<8x64xf32>
    %18 = arith.maximumf %16, %17 : vector<8x64xf32>
    %c0_17 = arith.constant 0 : index
    %c0_18 = arith.constant 0 : index
    %19 = vector.load %arg8[%c0_17, %c0_18] : memref<64x32xf32, #tpu.memory_space<vmem>>, vector<64x32xf32>
    %cst_19 = arith.constant dense<0.000000e+00> : vector<8x32xf32>
    %20 = tpu.matmul %18, %19, %cst_19 {dimension_numbers = #tpu.dot_dimension_numbers<[1], [0], [0], [1], [0, 0, 1, 1], [], []>} : vector<8x64xf32>, vector<64x32xf32>, vector<8x32xf32> -> vector<8x32xf32>
    %c0_20 = arith.constant 0 : index
    %c0_21 = arith.constant 0 : index
    %21 = vector.load %arg9[%c0_20, %c0_21] : memref<1x32xf32, #tpu.memory_space<vmem>>, vector<1x32xf32>
    %22 = vector.broadcast %21 : vector<1x32xf32> to vector<8x32xf32>
    %23 = arith.addf %20, %22 : vector<8x32xf32>
    %cst_22 = arith.constant 0.000000e+00 : f32
    %24 = vector.broadcast %cst_22 : f32 to vector<8x32xf32>
    %25 = arith.maximumf %23, %24 : vector<8x32xf32>
    %c0_23 = arith.constant 0 : index
    %c0_24 = arith.constant 0 : index
    %26 = vector.load %arg10[%c0_23, %c0_24] : memref<1x32xf32, #tpu.memory_space<vmem>>, vector<1x32xf32>
    %27 = vector.broadcast %26 : vector<1x32xf32> to vector<8x32xf32>
    %28 = arith.mulf %25, %27 : vector<8x32xf32>
    %cst_25 = arith.constant dense<0.000000e+00> : vector<8xf32>
    %29 = vector.multi_reduction <add>, %28, %cst_25 [1] : vector<8x32xf32> to vector<8xf32>
    %30 = vector.shape_cast %29 : vector<8xf32> to vector<8x1xf32>
    %c0_26 = arith.constant 0 : index
    %31 = memref.load %arg11[%c0_26] : memref<1xf32, #tpu.memory_space<smem>>
    %32 = vector.broadcast %31 : f32 to vector<8x1xf32>
    %33 = arith.addf %30, %32 : vector<8x1xf32>
    %c0_27 = arith.constant 0 : index
    %c0_28 = arith.constant 0 : index
    %34 = vector.load %arg12[%c0_27, %c0_28] : memref<8x1xf32, #tpu.memory_space<vmem>>, vector<8x1xf32>
    tpu.vector_store %arg12[%c0_27, %c0_28], %33 {strides = array<i32>} : memref<8x1xf32, #tpu.memory_space<vmem>>, vector<8x1xf32>,
    return
  }
  func.func @transform_0(%arg0: i32) -> (i32, i32) {
    %c0_i32 = arith.constant 0 : i32
    %c0_i32_0 = arith.constant 0 : i32
    return %arg0, %c0_i32 : i32, i32
  }
  func.func @transform_1(%arg0: i32) -> (i32, i32) {
    %c0_i32 = arith.constant 0 : i32
    %c0_i32_0 = arith.constant 0 : i32
    return %arg0, %c0_i32 : i32, i32
  }
  func.func @transform_2(%arg0: i32) -> (i32, i32) {
    %c0_i32 = arith.constant 0 : i32
    %c0_i32_0 = arith.constant 0 : i32
    %c0_i32_1 = arith.constant 0 : i32
    return %c0_i32, %c0_i32_0 : i32, i32
  }
  func.func @transform_3(%arg0: i32) -> (i32, i32) {
    %c0_i32 = arith.constant 0 : i32
    %c0_i32_0 = arith.constant 0 : i32
    %c0_i32_1 = arith.constant 0 : i32
    return %c0_i32, %c0_i32_0 : i32, i32
  }
  func.func @transform_4(%arg0: i32) -> (i32, i32) {
    %c0_i32 = arith.constant 0 : i32
    %c0_i32_0 = arith.constant 0 : i32
    %c0_i32_1 = arith.constant 0 : i32
    return %c0_i32, %c0_i32_0 : i32, i32
  }
  func.func @transform_5(%arg0: i32) -> (i32, i32) {
    %c0_i32 = arith.constant 0 : i32
    %c0_i32_0 = arith.constant 0 : i32
    %c0_i32_1 = arith.constant 0 : i32
    return %c0_i32, %c0_i32_0 : i32, i32
  }
  func.func @transform_6(%arg0: i32) -> (i32, i32) {
    %c0_i32 = arith.constant 0 : i32
    %c0_i32_0 = arith.constant 0 : i32
    %c0_i32_1 = arith.constant 0 : i32
    return %c0_i32, %c0_i32_0 : i32, i32
  }
  func.func @transform_7(%arg0: i32) -> (i32, i32) {
    %c0_i32 = arith.constant 0 : i32
    %c0_i32_0 = arith.constant 0 : i32
    %c0_i32_1 = arith.constant 0 : i32
    return %c0_i32, %c0_i32_0 : i32, i32
  }
  func.func @transform_8(%arg0: i32) -> (i32, i32) {
    %c0_i32 = arith.constant 0 : i32
    %c0_i32_0 = arith.constant 0 : i32
    %c0_i32_1 = arith.constant 0 : i32
    return %c0_i32, %c0_i32_0 : i32, i32
  }
  func.func @transform_9(%arg0: i32) -> (i32, i32) {
    %c0_i32 = arith.constant 0 : i32
    %c0_i32_0 = arith.constant 0 : i32
    %c0_i32_1 = arith.constant 0 : i32
    return %c0_i32, %c0_i32_0 : i32, i32
  }
  func.func @transform_10(%arg0: i32) -> i32 {
    %c0_i32 = arith.constant 0 : i32
    %c0_i32_0 = arith.constant 0 : i32
    return %c0_i32 : i32
  }
  func.func @transform_11(%arg0: i32) -> (i32, i32) {
    %c0_i32 = arith.constant 0 : i32
    %c0_i32_0 = arith.constant 0 : i32
    return %arg0, %c0_i32 : i32, i32
  }
}

</mosaic_0001>

<llo_original>
// kernel: tpu_custom_call.1
$region0: #{tpu_custom_call.1}
  #allocation0 [shape = 'u32[]', space=smem, size = 0x4, offset = 0x4, fixed_abs, tag = 'smem constant byte address 0x4 - core index']
  #allocation1 [shape = 'u32[144,128]{1,0:T(1,128)}', space=vmem, size = 0x12000, scoped, tag = 'internal scratch']
  #allocation2 [shape = 'f32[1]{0:T(128)S(6)}', space=smem, size = 0x200, scoped, tag = 'scoped memory for tpu_custom_call.1']
  %s0 = inlined_call_operand.vmem [shape: f32[8,16], index: 0, kind: input, shape index: {}]
  %s1 = inlined_call_operand.vmem [shape: f32[8,4], index: 1, kind: input, shape index: {}]
  %s2 = inlined_call_operand.vmem [shape: f32[16,128], index: 2, kind: input, shape index: {}]
  %s3 = inlined_call_operand.vmem [shape: f32[4,128], index: 3, kind: input, shape index: {}]
  %s4 = inlined_call_operand.vmem [shape: f32[1,128], index: 4, kind: input, shape index: {}]
  %s5 = inlined_call_operand.vmem [shape: f32[128,64], index: 5, kind: input, shape index: {}]
  %s6 = inlined_call_operand.vmem [shape: f32[1,64], index: 6, kind: input, shape index: {}]
  %s7 = inlined_call_operand.vmem [shape: f32[64,32], index: 7, kind: input, shape index: {}]
  %s8 = inlined_call_operand.vmem [shape: f32[1,32], index: 8, kind: input, shape index: {}]
  %s9 = inlined_call_operand.vmem [shape: f32[1,32], index: 9, kind: input, shape index: {}]
  %s10 = inlined_call_operand.<no memory space> [shape: f32[1], index: 10, kind: input, shape index: {}]
  %s11 = inlined_call_operand.vmem [shape: f32[8,1], index: 11, kind: output, shape index: {}]
  %s12 = sld [smem:[#allocation0]]
  $region54: #{tpu_custom_call.1} parent=0
    _
  %s14 = ssub.s32 1, %s12
  %s15 = scalar_select 0, %s14, %s12
  %16 = sst [smem:[#allocation2]] %s10
  // Predicated region
  $region2: #{tpu_custom_call.1} parent=0 // pred_check
    _
  $region3: #{tpu_custom_call.1} parent=0 // pred_check_branch
    %18 = sbr.rel (0) target = $region5
  $region4: #{tpu_custom_call.1} parent=0 // pred_region
    _
  $region5: #{tpu_custom_call.1} parent=0 // pred_fallthru
    _
  // Predicated region
  $region6: #{tpu_custom_call.1} parent=0 // pred_check
    _
  $region7: #{tpu_custom_call.1} parent=0 // pred_check_branch
    %20 = sbr.rel (0) target = $region9
  $region8: #{tpu_custom_call.1} parent=0 // pred_region
    _
  $region9: #{tpu_custom_call.1} parent=0 // pred_fallthru
    _
  // Predicated region
  $region10: #{tpu_custom_call.1} parent=0 // pred_check
    _
  $region11: #{tpu_custom_call.1} parent=0 // pred_check_branch
    %22 = sbr.rel (0) target = $region13
  $region12: #{tpu_custom_call.1} parent=0 // pred_region
    _
  $region13: #{tpu_custom_call.1} parent=0 // pred_fallthru
    _
  // Predicated region
  $region14: #{tpu_custom_call.1} parent=0 // pred_check
    _
  $region15: #{tpu_custom_call.1} parent=0 // pred_check_branch
    %24 = sbr.rel (0) target = $region17
  $region16: #{tpu_custom_call.1} parent=0 // pred_region
    _
  $region17: #{tpu_custom_call.1} parent=0 // pred_fallthru
    _
  // Predicated region
  $region18: #{tpu_custom_call.1} parent=0 // pred_check
    _
  $region19: #{tpu_custom_call.1} parent=0 // pred_check_branch
    %26 = sbr.rel (0) target = $region21
  $region20: #{tpu_custom_call.1} parent=0 // pred_region
    _
  $region21: #{tpu_custom_call.1} parent=0 // pred_fallthru
    _
  // Predicated region
  $region22: #{tpu_custom_call.1} parent=0 // pred_check
    _
  $region23: #{tpu_custom_call.1} parent=0 // pred_check_branch
    %28 = sbr.rel (0) target = $region25
  $region24: #{tpu_custom_call.1} parent=0 // pred_region
    _
  $region25: #{tpu_custom_call.1} parent=0 // pred_fallthru
    _
  // Predicated region
  $region26: #{tpu_custom_call.1} parent=0 // pred_check
    _
  $region27: #{tpu_custom_call.1} parent=0 // pred_check_branch
    %30 = sbr.rel (0) target = $region29
  $region28: #{tpu_custom_call.1} parent=0 // pred_region
    _
  $region29: #{tpu_custom_call.1} parent=0 // pred_fallthru
    _
  // Predicated region
  $region30: #{tpu_custom_call.1} parent=0 // pred_check
    _
  $region31: #{tpu_custom_call.1} parent=0 // pred_check_branch
    %32 = sbr.rel (0) target = $region33
  $region32: #{tpu_custom_call.1} parent=0 // pred_region
    _
  $region33: #{tpu_custom_call.1} parent=0 // pred_fallthru
    _
  // Predicated region
  $region34: #{tpu_custom_call.1} parent=0 // pred_check
    _
  $region35: #{tpu_custom_call.1} parent=0 // pred_check_branch
    %34 = sbr.rel (0) target = $region37
  $region36: #{tpu_custom_call.1} parent=0 // pred_region
    _
  $region37: #{tpu_custom_call.1} parent=0 // pred_fallthru
    _
  // Predicated region
  $region38: #{tpu_custom_call.1} parent=0 // pred_check
    _
  $region39: #{tpu_custom_call.1} parent=0 // pred_check_branch
    %36 = sbr.rel (0) target = $region41
  $region40: #{tpu_custom_call.1} parent=0 // pred_region
    _
  $region41: #{tpu_custom_call.1} parent=0 // pred_fallthru
    _
  // Predicated region
  $region42: #{tpu_custom_call.1} parent=0 // pred_check
    _
  $region43: #{tpu_custom_call.1} parent=0 // pred_check_branch
    %38 = sbr.rel (0) target = $region45
  $region44: #{tpu_custom_call.1} parent=0 // pred_region
    _
  $region45: #{tpu_custom_call.1} parent=0 // pred_fallthru
    _
  %v39 = vld [vmem:[%s0] sm:$0xff]
  %v40 = vld [vmem:[%s2] sm:$0xff]
  %v41 = vld [vmem:[%s2 + $0x8] sm:$0xff]
  %v42 = vld [vmem:[%s1] sm:$0xff]
  %v43 = vld [vmem:[%s3] sm:$0xf]
  %vm44 = vcmask 31744
  %v46 = vsel %vm44, %v42, 0
  %vm48 = vcmask 1043456
  %v50 = vsel %vm48, %v43, 0
  %52 = vmatprep.subr.mxu0 0.0
  %53 = vmatpush1.msra.mxu0 0.0
  %54 = vmatprep.subr.mxu0 0.0
  %55 = vmatpush1.msra.mxu0 0.0
  %56 = vmatprep.subr.mxu0 0.0
  %57 = vmatpush1.msra.mxu0 0.0
  %58 = vmatprep.subr.mxu0 0.0
  %59 = vmatpush1.msra.mxu0 0.0
  %60 = vmatprep.subr.mxu0 0.0
  %61 = vmatpush1.msra.mxu0 0.0
  %62 = vmatprep.subr.mxu0 0.0
  %63 = vmatpush1.msra.mxu0 0.0
  %64 = vmatprep.subr.mxu0 0.0
  %65 = vmatpush1.msra.mxu0 0.0
  %66 = vmatprep.subr.mxu0 0.0
  %67 = vmatpush1.msra.mxu0 0.0
  %68 = vmatprep.subr.mxu0 0.0
  %69 = vmatpush1.msra.mxu0 0.0
  %70 = vmatprep.subr.mxu0 0.0
  %71 = vmatpush1.msra.mxu0 0.0
  %72 = vmatprep.subr.mxu0 0.0
  %73 = vmatpush1.msra.mxu0 0.0
  %74 = vmatprep.subr.mxu0 0.0
  %75 = vmatpush1.msra.mxu0 0.0
  %76 = vmatprep.subr.mxu0 0.0
  %77 = vmatpush1.msra.mxu0 0.0
  %78 = vmatprep.subr.mxu0 0.0
  %79 = vmatpush1.msra.mxu0 0.0
  %80 = vmatprep.subr.mxu0 0.0
  %81 = vmatpush1.msra.mxu0 0.0
  %82 = vmatprep.subr.mxu0 0.0
  %83 = vmatpush1.msra.mxu0 %v50
  %84 = vmatprep.subr.mxu0 0.0
  %85 = vmatpush2.msra.mxu0 0.0
  %86 = vmatprep.subr.mxu0 0.0
  %87 = vmatpush2.msra.mxu0 0.0
  %88 = vmatprep.subr.mxu0 0.0
  %89 = vmatpush2.msra.mxu0 0.0
  %90 = vmatprep.subr.mxu0 0.0
  %91 = vmatpush2.msra.mxu0 0.0
  %92 = vmatprep.subr.mxu0 0.0
  %93 = vmatpush2.msra.mxu0 0.0
  %94 = vmatprep.subr.mxu0 0.0
  %95 = vmatpush2.msra.mxu0 0.0
  %96 = vmatprep.subr.mxu0 0.0
  %97 = vmatpush2.msra.mxu0 0.0
  %98 = vmatprep.subr.mxu0 0.0
  %99 = vmatpush2.msra.mxu0 0.0
  %100 = vmatprep.subr.mxu0 0.0
  %101 = vmatpush2.msra.mxu0 0.0
  %102 = vmatprep.subr.mxu0 0.0
  %103 = vmatpush2.msra.mxu0 0.0
  %104 = vmatprep.subr.mxu0 0.0
  %105 = vmatpush2.msra.mxu0 0.0
  %106 = vmatprep.subr.mxu0 0.0
  %107 = vmatpush2.msra.mxu0 0.0
  %108 = vmatprep.subr.mxu0 0.0
  %109 = vmatpush2.msra.mxu0 0.0
  %110 = vmatprep.subr.mxu0 0.0
  %111 = vmatpush2.msra.mxu0 0.0
  %112 = vmatprep.subr.mxu0 0.0
  %113 = vmatpush2.msra.mxu0 0.0
  %114 = vmatprep.subr.mxu0 0.0
  %115 = vmatpush2.msra.mxu0 0.0
  %116 = vmatprep.mubr.f32.mxu0 0.0
  %117 = vmatmul.mubr.f32.gmra.mxu0 %v46
  %v118 = vpop.f32.mrf.mxu0
  %v119 = vadd.f32 0.0, %v118
  %v120 = vpop.f32.mrf.mxu0
  %121 = vdwg.mxu0
  %vm122 = vcmask 130048
  %v124 = vsel %vm122, %v39, 0
  %126 = vmatprep.subr.mxu0 0.0
  %127 = vmatpush1.msra.mxu0 0.0
  %128 = vmatprep.subr.mxu0 0.0
  %129 = vmatpush1.msra.mxu0 0.0
  %130 = vmatprep.subr.mxu0 0.0
  %131 = vmatpush1.msra.mxu0 0.0
  %132 = vmatprep.subr.mxu0 0.0
  %133 = vmatpush1.msra.mxu0 0.0
  %134 = vmatprep.subr.mxu0 0.0
  %135 = vmatpush1.msra.mxu0 0.0
  %136 = vmatprep.subr.mxu0 0.0
  %137 = vmatpush1.msra.mxu0 0.0
  %138 = vmatprep.subr.mxu0 0.0
  %139 = vmatpush1.msra.mxu0 0.0
  %140 = vmatprep.subr.mxu0 0.0
  %141 = vmatpush1.msra.mxu0 0.0
  %142 = vmatprep.subr.mxu0 0.0
  %143 = vmatpush1.msra.mxu0 0.0
  %144 = vmatprep.subr.mxu0 0.0
  %145 = vmatpush1.msra.mxu0 0.0
  %146 = vmatprep.subr.mxu0 0.0
  %147 = vmatpush1.msra.mxu0 0.0
  %148 = vmatprep.subr.mxu0 0.0
  %149 = vmatpush1.msra.mxu0 0.0
  %150 = vmatprep.subr.mxu0 0.0
  %151 = vmatpush1.msra.mxu0 0.0
  %152 = vmatprep.subr.mxu0 0.0
  %153 = vmatpush1.msra.mxu0 0.0
  %154 = vmatprep.subr.mxu0 0.0
  %155 = vmatpush1.msra.mxu0 %v41
  %156 = vmatprep.subr.mxu0 0.0
  %157 = vmatpush1.msra.mxu0 %v40
  %158 = vmatprep.subr.mxu0 0.0
  %159 = vmatpush2.msra.mxu0 0.0
  %160 = vmatprep.subr.mxu0 0.0
  %161 = vmatpush2.msra.mxu0 0.0
  %162 = vmatprep.subr.mxu0 0.0
  %163 = vmatpush2.msra.mxu0 0.0
  %164 = vmatprep.subr.mxu0 0.0
  %165 = vmatpush2.msra.mxu0 0.0
  %166 = vmatprep.subr.mxu0 0.0
  %167 = vmatpush2.msra.mxu0 0.0
  %168 = vmatprep.subr.mxu0 0.0
  %169 = vmatpush2.msra.mxu0 0.0
  %170 = vmatprep.subr.mxu0 0.0
  %171 = vmatpush2.msra.mxu0 0.0
  %172 = vmatprep.subr.mxu0 0.0
  %173 = vmatpush2.msra.mxu0 0.0
  %174 = vmatprep.subr.mxu0 0.0
  %175 = vmatpush2.msra.mxu0 0.0
  %176 = vmatprep.subr.mxu0 0.0
  %177 = vmatpush2.msra.mxu0 0.0
  %178 = vmatprep.subr.mxu0 0.0
  %179 = vmatpush2.msra.mxu0 0.0
  %180 = vmatprep.subr.mxu0 0.0
  %181 = vmatpush2.msra.mxu0 0.0
  %182 = vmatprep.subr.mxu0 0.0
  %183 = vmatpush2.msra.mxu0 0.0
  %184 = vmatprep.subr.mxu0 0.0
  %185 = vmatpush2.msra.mxu0 0.0
  %186 = vmatprep.subr.mxu0 0.0
  %187 = vmatpush2.msra.mxu0 0.0
  %188 = vmatprep.subr.mxu0 0.0
  %189 = vmatpush2.msra.mxu0 0.0
  %190 = vmatprep.mubr.f32.mxu0 0.0
  %191 = vmatmul.mubr.f32.gmra.mxu0 %v124
  %v192 = vpop.f32.mrf.mxu0
  %v193 = vadd.f32 %v119, %v192
  %v194 = vpop.f32.mrf.mxu0
  %195 = vdwg.mxu0
  %v196 = vld [vmem:[%s4] sm:$0x1]
  %v198 = vlaneseq
  %v199 = vshrl.u32 %v198, 7
  %v200 = vsub.s32 0, %v199
  %v201 = vrot.slane %v196, %v200
  %v203 = vadd.f32 %v193, %v201
  %v204 = vmax.f32 %v203, 0.0
  %v205 = vld [vmem:[%s5] sm:$0xff]
  %v206 = vld [vmem:[%s5 + $0x8] sm:$0xff]
  %v207 = vld [vmem:[%s5 + $0x10] sm:$0xff]
  %v208 = vld [vmem:[%s5 + $0x18] sm:$0xff]
  %v209 = vld [vmem:[%s5 + $0x20] sm:$0xff]
  %v210 = vld [vmem:[%s5 + $0x28] sm:$0xff]
  %v211 = vld [vmem:[%s5 + $0x30] sm:$0xff]
  %v212 = vld [vmem:[%s5 + $0x38] sm:$0xff]
  %v213 = vld [vmem:[%s5 + $0x40] sm:$0xff]
  %v214 = vld [vmem:[%s5 + $0x48] sm:$0xff]
  %v215 = vld [vmem:[%s5 + $0x50] sm:$0xff]
  %v216 = vld [vmem:[%s5 + $0x58] sm:$0xff]
  %v217 = vld [vmem:[%s5 + $0x60] sm:$0xff]
  %v218 = vld [vmem:[%s5 + $0x68] sm:$0xff]
  %v219 = vld [vmem:[%s5 + $0x70] sm:$0xff]
  %v220 = vld [vmem:[%s5 + $0x78] sm:$0xff]
  %v221 = vld [vmem:[%s6] sm:$0x1]
  %v223 = vlaneseq
  %v224 = vshrl.u32 %v223, 7
  %v225 = vsub.s32 0, %v224
  %v226 = vrot.slane %v221, %v225
  %228 = vmatprep.subr.mxu0 0.0
  %229 = vmatpush1.msra.mxu0 %v220
  %230 = vmatprep.subr.mxu0 0.0
  %231 = vmatpush1.msra.mxu0 %v219
  %232 = vmatprep.subr.mxu0 0.0
  %233 = vmatpush1.msra.mxu0 %v218
  %234 = vmatprep.subr.mxu0 0.0
  %235 = vmatpush1.msra.mxu0 %v217
  %236 = vmatprep.subr.mxu0 0.0
  %237 = vmatpush1.msra.mxu0 %v216
  %238 = vmatprep.subr.mxu0 0.0
  %239 = vmatpush1.msra.mxu0 %v215
  %240 = vmatprep.subr.mxu0 0.0
  %241 = vmatpush1.msra.mxu0 %v214
  %242 = vmatprep.subr.mxu0 0.0
  %243 = vmatpush1.msra.mxu0 %v213
  %244 = vmatprep.subr.mxu0 0.0
  %245 = vmatpush1.msra.mxu0 %v212
  %246 = vmatprep.subr.mxu0 0.0
  %247 = vmatpush1.msra.mxu0 %v211
  %248 = vmatprep.subr.mxu0 0.0
  %249 = vmatpush1.msra.mxu0 %v210
  %250 = vmatprep.subr.mxu0 0.0
  %251 = vmatpush1.msra.mxu0 %v209
  %252 = vmatprep.subr.mxu0 0.0
  %253 = vmatpush1.msra.mxu0 %v208
  %254 = vmatprep.subr.mxu0 0.0
  %255 = vmatpush1.msra.mxu0 %v207
  %256 = vmatprep.subr.mxu0 0.0
  %257 = vmatpush1.msra.mxu0 %v206
  %258 = vmatprep.subr.mxu0 0.0
  %259 = vmatpush1.msra.mxu0 %v205
  %260 = vmatprep.subr.mxu0 0.0
  %261 = vmatpush2.msra.mxu0 0.0
  %262 = vmatprep.subr.mxu0 0.0
  %263 = vmatpush2.msra.mxu0 0.0
  %264 = vmatprep.subr.mxu0 0.0
  %265 = vmatpush2.msra.mxu0 0.0
  %266 = vmatprep.subr.mxu0 0.0
  %267 = vmatpush2.msra.mxu0 0.0
  %268 = vmatprep.subr.mxu0 0.0
  %269 = vmatpush2.msra.mxu0 0.0
  %270 = vmatprep.subr.mxu0 0.0
  %271 = vmatpush2.msra.mxu0 0.0
  %272 = vmatprep.subr.mxu0 0.0
  %273 = vmatpush2.msra.mxu0 0.0
  %274 = vmatprep.subr.mxu0 0.0
  %275 = vmatpush2.msra.mxu0 0.0
  %276 = vmatprep.subr.mxu0 0.0
  %277 = vmatpush2.msra.mxu0 0.0
  %278 = vmatprep.subr.mxu0 0.0
  %279 = vmatpush2.msra.mxu0 0.0
  %280 = vmatprep.subr.mxu0 0.0
  %281 = vmatpush2.msra.mxu0 0.0
  %282 = vmatprep.subr.mxu0 0.0
  %283 = vmatpush2.msra.mxu0 0.0
  %284 = vmatprep.subr.mxu0 0.0
  %285 = vmatpush2.msra.mxu0 0.0
  %286 = vmatprep.subr.mxu0 0.0
  %287 = vmatpush2.msra.mxu0 0.0
  %288 = vmatprep.subr.mxu0 0.0
  %289 = vmatpush2.msra.mxu0 0.0
  %290 = vmatprep.subr.mxu0 0.0
  %291 = vmatpush2.msra.mxu0 0.0
  %292 = vmatprep.mubr.f32.mxu0 0.0
  %293 = vmatmul.mubr.f32.gmra.mxu0 %v204
  %v294 = vpop.f32.mrf.mxu0
  %v295 = vadd.f32 %v226, %v294
  %v296 = vpop.f32.mrf.mxu0
  %297 = vdwg.mxu0
  %v298 = vmax.f32 %v295, 0.0
  %v299 = vld [vmem:[%s7] sm:$0xff]
  %v300 = vld [vmem:[%s7 + $0x8] sm:$0xff]
  %v301 = vld [vmem:[%s7 + $0x10] sm:$0xff]
  %v302 = vld [vmem:[%s7 + $0x18] sm:$0xff]
  %v303 = vld [vmem:[%s7 + $0x20] sm:$0xff]
  %v304 = vld [vmem:[%s7 + $0x28] sm:$0xff]
  %v305 = vld [vmem:[%s7 + $0x30] sm:$0xff]
  %v306 = vld [vmem:[%s7 + $0x38] sm:$0xff]
  %v307 = vld [vmem:[%s8] sm:$0x1]
  %v309 = vlaneseq
  %v310 = vshrl.u32 %v309, 7
  %v311 = vsub.s32 0, %v310
  %v312 = vrot.slane %v307, %v311
  %vm314 = vcmask 523264
  %v316 = vsel %vm314, %v298, 0
  %318 = vmatprep.subr.mxu0 0.0
  %319 = vmatpush1.msra.mxu0 0.0
  %320 = vmatprep.subr.mxu0 0.0
  %321 = vmatpush1.msra.mxu0 0.0
  %322 = vmatprep.subr.mxu0 0.0
  %323 = vmatpush1.msra.mxu0 0.0
  %324 = vmatprep.subr.mxu0 0.0
  %325 = vmatpush1.msra.mxu0 0.0
  %326 = vmatprep.subr.mxu0 0.0
  %327 = vmatpush1.msra.mxu0 0.0
  %328 = vmatprep.subr.mxu0 0.0
  %329 = vmatpush1.msra.mxu0 0.0
  %330 = vmatprep.subr.mxu0 0.0
  %331 = vmatpush1.msra.mxu0 0.0
  %332 = vmatprep.subr.mxu0 0.0
  %333 = vmatpush1.msra.mxu0 0.0
  %334 = vmatprep.subr.mxu0 0.0
  %335 = vmatpush1.msra.mxu0 %v306
  %336 = vmatprep.subr.mxu0 0.0
  %337 = vmatpush1.msra.mxu0 %v305
  %338 = vmatprep.subr.mxu0 0.0
  %339 = vmatpush1.msra.mxu0 %v304
  %340 = vmatprep.subr.mxu0 0.0
  %341 = vmatpush1.msra.mxu0 %v303
  %342 = vmatprep.subr.mxu0 0.0
  %343 = vmatpush1.msra.mxu0 %v302
  %344 = vmatprep.subr.mxu0 0.0
  %345 = vmatpush1.msra.mxu0 %v301
  %346 = vmatprep.subr.mxu0 0.0
  %347 = vmatpush1.msra.mxu0 %v300
  %348 = vmatprep.subr.mxu0 0.0
  %349 = vmatpush1.msra.mxu0 %v299
  %350 = vmatprep.subr.mxu0 0.0
  %351 = vmatpush2.msra.mxu0 0.0
  %352 = vmatprep.subr.mxu0 0.0
  %353 = vmatpush2.msra.mxu0 0.0
  %354 = vmatprep.subr.mxu0 0.0
  %355 = vmatpush2.msra.mxu0 0.0
  %356 = vmatprep.subr.mxu0 0.0
  %357 = vmatpush2.msra.mxu0 0.0
  %358 = vmatprep.subr.mxu0 0.0
  %359 = vmatpush2.msra.mxu0 0.0
  %360 = vmatprep.subr.mxu0 0.0
  %361 = vmatpush2.msra.mxu0 0.0
  %362 = vmatprep.subr.mxu0 0.0
  %363 = vmatpush2.msra.mxu0 0.0
  %364 = vmatprep.subr.mxu0 0.0
  %365 = vmatpush2.msra.mxu0 0.0
  %366 = vmatprep.subr.mxu0 0.0
  %367 = vmatpush2.msra.mxu0 0.0
  %368 = vmatprep.subr.mxu0 0.0
  %369 = vmatpush2.msra.mxu0 0.0
  %370 = vmatprep.subr.mxu0 0.0
  %371 = vmatpush2.msra.mxu0 0.0
  %372 = vmatprep.subr.mxu0 0.0
  %373 = vmatpush2.msra.mxu0 0.0
  %374 = vmatprep.subr.mxu0 0.0
  %375 = vmatpush2.msra.mxu0 0.0
  %376 = vmatprep.subr.mxu0 0.0
  %377 = vmatpush2.msra.mxu0 0.0
  %378 = vmatprep.subr.mxu0 0.0
  %379 = vmatpush2.msra.mxu0 0.0
  %380 = vmatprep.subr.mxu0 0.0
  %381 = vmatpush2.msra.mxu0 0.0
  %382 = vmatprep.mubr.f32.mxu0 0.0
  %383 = vmatmul.mubr.f32.gmra.mxu0 %v316
  %v384 = vpop.f32.mrf.mxu0
  %v385 = vadd.f32 %v312, %v384
  %v386 = vpop.f32.mrf.mxu0
  %387 = vdwg.mxu0
  %v388 = vmax.f32 %v385, 0.0
  %v389 = vld [vmem:[%s9] sm:$0x1]
  %v391 = vlaneseq
  %v392 = vshrl.u32 %v391, 7
  %v393 = vsub.s32 0, %v392
  %v394 = vrot.slane %v389, %v393
  %v396 = vmul.f32 %v388, %v394
  %vm397 = vcmask 261120
  %v398 = vsel %vm397, %v396, 0.0
  %399 = vadd.xlane.f32.xlu0 %v398
  %v400 = vpop.xlane.xlu0 %399
  %s401 = sld [smem:[#allocation2]]
  %v402 = vstv %s401
  %v403 = vadd.f32 %v400, %v402
  %vm404 = vcmask 7168
  %405 = vst.msk [vmem:[%s11] sm:$0xff] %vm404, %v403
  // Predicated region
  $region46: #{tpu_custom_call.1} parent=0 // pred_check
    _
  $region47: #{tpu_custom_call.1} parent=0 // pred_check_branch
    %407 = sbr.rel (0) target = $region49
  $region48: #{tpu_custom_call.1} parent=0 // pred_region
    _
  $region49: #{tpu_custom_call.1} parent=0 // pred_fallthru
    _
  // Predicated region
  $region50: #{tpu_custom_call.1} parent=0 // pred_check
    _
  $region51: #{tpu_custom_call.1} parent=0 // pred_check_branch
    %409 = sbr.rel (0) target = $region53
  $region52: #{tpu_custom_call.1} parent=0 // pred_region
    _
  $region53: #{tpu_custom_call.1} parent=0 // pred_fallthru
    _

</llo_original>
